<compile_context>
chip_gen: v5e
topology: v5e:2x2
jax: 0.10.0
libtpu: 0.0.40
codegen_flags: <defaults>
</compile_context>

<pallas_src>
import functools

import jax
import jax.numpy as jnp
from jax import lax
from jax.experimental import pallas as pl
from jax.experimental.pallas import tpu as pltpu


def _mlp_kernel(num_layers, compute_dtype, *refs):
    """Fused MLP forward over one batch tile.

    refs = (x_ref   [bm, D_in]           (input dtype, batch on sublanes),
            w0_ref  [h0, D_in], ..., w_{L-1}_ref [D_out_p, h_{L-2}]   (compute_dtype),
            bias_ref [max_out, L]         (f32, column l = layer-l bias, zero padded),
            o_ref   [D_out_p, bm])        (lane-dense output slab)

    All weights are tiny and fully VMEM-resident, so the whole forward pass for a batch
    tile runs in one grid step: MXU matmuls + f32 bias-add/ReLU on the VPU.
    """
    x_ref = refs[0]
    w_refs = refs[1:1 + num_layers]
    bias_ref = refs[1 + num_layers]
    o_ref = refs[2 + num_layers]

    biases = bias_ref[...]                          # [max_out, L] f32 (tiny)
    h = x_ref[...].astype(compute_dtype)            # [bm, D_in]  (batch on sublanes)
    for layer in range(num_layers):
        w = w_refs[layer][...]                      # [out, in] compute_dtype
        out_dim = w.shape[0]
        b = biases[:out_dim, layer:layer + 1]       # [out, 1] f32, broadcasts across lanes
        if layer == 0:
            # Contract over x's last (lane) axis: [out0, in] x [bm, in] -> [out0, bm].
            # The operand transpose rides the (idle) XLU; avoids a wrapper-side x.T pass.
            acc = lax.dot_general(w, h, (((1,), (1,)), ((), ())),
                                  preferred_element_type=jnp.float32) + b
        else:
            # h is already [in, bm] (batch on lanes): plain W @ H.
            acc = jnp.dot(w, h, preferred_element_type=jnp.float32) + b
        if layer < num_layers - 1:
            h = jnp.maximum(acc, 0.0).astype(compute_dtype)   # ReLU between layers (f32 VPU)
        else:
            o_ref[...] = acc.astype(o_ref.dtype)              # no activation on output


def prepare_params(params, compute_dtype=jnp.bfloat16):
    """One-time parameter packing (hoisted out of the per-call path).

    params: list of (w [out, in] torch-native, b [out]) per Linear layer, in order.
    Returns dict with:
      weights    : list of compute_dtype weights; the LAST layer's out-dim is zero-padded
                   up to a multiple of 8 sublanes (full-sublane f32 output store on v5e).
      bias_stack : [max_out, L] f32, column l = layer-l bias (zero padded).
      d_out      : true (unpadded) output dimension.
    """
    num_layers = len(params)
    d_out = params[-1][0].shape[0]
    d_out_p = -(-d_out // 8) * 8   # round up to a multiple of 8 sublanes

    weights, biases = [], []
    for l, (w, b) in enumerate(params):
        w = jnp.asarray(w, jnp.float32)
        b = jnp.asarray(b, jnp.float32)
        if l == num_layers - 1 and d_out_p != d_out:
            w = jnp.pad(w, ((0, d_out_p - d_out), (0, 0)))
            b = jnp.pad(b, (0, d_out_p - d_out))
        weights.append(w.astype(compute_dtype))
        biases.append(b)

    max_out = max(w.shape[0] for w in weights)
    bias_stack = jnp.stack([jnp.pad(b, (0, max_out - b.shape[0])) for b in biases], axis=1)
    return {"weights": weights, "bias_stack": bias_stack, "d_out": d_out}


def mlp_forward(x, weights, bias_stack, d_out, *,
                block_b=1024, single_step_max=2048, out_dtype=None):
    """Run the fused MLP Pallas kernel.

    x          : [B, D_in] activations (row-major, like torch; fed to the kernel as-is).
    weights    : packed weights from prepare_params (compute dtype, last layer padded).
    bias_stack : [max_out, L] f32 stacked biases.
    d_out      : true output dimension (static).

    Returns [B, d_out] in out_dtype (default x.dtype).
    """
    num_layers = len(weights)
    compute_dtype = weights[0].dtype
    B, d_in = x.shape
    d_out_p = weights[-1].shape[0]
    max_out = bias_stack.shape[0]
    out_dtype = x.dtype if out_dtype is None else out_dtype

    # One fat grid step for small/medium batches (amortize ~0.35us/step, don't split
    # trivial work across v7x's two TCs); otherwise lane-dense tiles of block_b rows.
    if B <= single_step_max:
        bm = B
    else:
        assert block_b % 128 == 0 and block_b <= 2048, \
            "block_b must be a multiple of 128 and <= 2048 (vreg-file budget)"
        bm = block_b
    num_steps = pl.cdiv(B, bm)

    # x streamed per batch tile; deeper pipeline when there are many steps (VMEM is
    # nowhere near its limit, so an extra buffer is free and hides DMA issue latency).
    if num_steps > 1:
        x_spec = pl.BlockSpec((bm, d_in), lambda i: (i, 0), pipeline_mode=pl.Buffered(3))
    else:
        x_spec = pl.BlockSpec((bm, d_in), lambda i: (i, 0))

    in_specs = [x_spec]
    inputs = [x]
    for w in weights:
        o, k = w.shape
        in_specs.append(pl.BlockSpec((o, k), lambda i: (0, 0)))   # full, resident weight
        inputs.append(w)
    in_specs.append(pl.BlockSpec((max_out, num_layers), lambda i: (0, 0)))
    inputs.append(bias_stack)

    out_specs = pl.BlockSpec((d_out_p, bm), lambda i: (0, i))     # lane-dense output slab

    kernel = functools.partial(_mlp_kernel, num_layers, compute_dtype)
    yt = pl.pallas_call(
        kernel,
        out_shape=jax.ShapeDtypeStruct((d_out_p, B), out_dtype),
        grid=(num_steps,),
        in_specs=in_specs,
        out_specs=out_specs,
        compiler_params=pltpu.CompilerParams(
            dimension_semantics=("parallel",),        # batch tiles shard across TCs (v7x)
            vmem_limit_bytes=32 * 1024 * 1024),       # explicit, safe on v5e/v6e/v7x
    )(*inputs)
    # Drop sublane padding, return to [B, d_out]; tiny slice+transpose fuses in XLA.
    return yt[:d_out].T


def build_params(model_info, key):
    """Deterministic torch-style Linear params: w [out, in], b [out], U(-1/sqrt(fan_in), +)."""
    d_in = model_info["D_in"]
    hidden = list(model_info["hidden_sizes"])
    d_out = model_info["D_out"]
    dims = [d_in] + hidden + [d_out]

    params = []
    for fan_in, fan_out in zip(dims[:-1], dims[1:]):
        key, kw, kb = jax.random.split(key, 3)
        bound = 1.0 / float(fan_in) ** 0.5
        w = jax.random.uniform(kw, (fan_out, fan_in), jnp.float32, -bound, bound)
        b = jax.random.uniform(kb, (fan_out,), jnp.float32, -bound, bound)
        params.append((w, b))
    return params


def mlp_reference(x, params, compute_dtype=jnp.bfloat16):
    """Pure-JAX reference mirroring the kernel's bf16-matmul / f32-accumulate math."""
    h = x.astype(compute_dtype)
    for i, (w, b) in enumerate(params):
        acc = jnp.dot(h, w.astype(compute_dtype).T,
                      preferred_element_type=jnp.float32) + b.astype(jnp.float32)
        if i < len(params) - 1:
            h = jnp.maximum(acc, 0.0).astype(compute_dtype)
        else:
            return acc.astype(x.dtype)


if __name__ == "__main__":
    # Config mirroring the module's `configs['torch_model_dict']`.
    configs = {
        "torch_model_dict": {
            "D_in": 8,
            "hidden_sizes": [32, 16],
            "D_out": 4,
            "activation": "relu",   # string -> nn.ReLU() in the original module
        }
    }
    model_info = configs["torch_model_dict"]

    key = jax.random.PRNGKey(0)
    key, kx1, kx2 = jax.random.split(key, 3)
    params = build_params(model_info, key)

    # One-time packing (bf16 cast, output-row padding, bias stacking) — NOT per forward.
    packed = prepare_params(params)

    fwd = jax.jit(mlp_forward, static_argnums=(3,),
                  static_argnames=("block_b", "single_step_max", "out_dtype"))

    # Case 1: whole batch in a single fat grid step (B <= single_step_max).
    x1 = jax.random.normal(kx1, (256, model_info["D_in"]), jnp.float32)
    out1 = jax.block_until_ready(
        fwd(x1, packed["weights"], packed["bias_stack"], packed["d_out"]))
    ref1 = mlp_reference(x1, params)
    assert out1.shape == (256, model_info["D_out"])
    assert jnp.allclose(out1, ref1, atol=1e-3, rtol=1e-3), "Pallas MLP mismatch (single step)"

    # Case 2: multi-step pipelined grid (ragged last tile, Buffered(3), parallel axis).
    x2 = jax.random.normal(kx2, (640, model_info["D_in"]), jnp.float32)
    out2 = jax.block_until_ready(
        fwd(x2, packed["weights"], packed["bias_stack"], packed["d_out"],
            block_b=256, single_step_max=256))
    ref2 = mlp_reference(x2, params)
    assert out2.shape == (640, model_info["D_out"])
    assert jnp.allclose(out2, ref2, atol=1e-3, rtol=1e-3), "Pallas MLP mismatch (multi step)"

    print("KERNEL_OK")
</pallas_src>

<mosaic_0001>
module attributes {stable_mosaic.version = 11 : i64} {
  func.func @_mlp_kernel(%arg0: i32, %arg1: memref<256x8xf32, #tpu.memory_space<vmem>>, %arg2: memref<32x8xbf16, #tpu.memory_space<vmem>>, %arg3: memref<16x32xbf16, #tpu.memory_space<vmem>>, %arg4: memref<8x16xbf16, #tpu.memory_space<vmem>>, %arg5: memref<32x3xf32, #tpu.memory_space<vmem>>, %arg6: memref<8x256xf32, #tpu.memory_space<vmem>>) attributes {dimension_semantics = [#tpu.dimension_semantics<parallel>], iteration_bounds = array<i64: 1>, scalar_prefetch = 0 : i64, scratch_operands = 0 : i64, tpu.core_type = #tpu.core_type<tc>, window_params = [{transform_indices = @transform_0, window_bounds = array<i64: 256, 8>}, {pipeline_mode = #tpu.pipeline_mode<synchronous>, transform_indices = @transform_1, window_bounds = array<i64: 32, 8>}, {pipeline_mode = #tpu.pipeline_mode<synchronous>, transform_indices = @transform_2, window_bounds = array<i64: 16, 32>}, {pipeline_mode = #tpu.pipeline_mode<synchronous>, transform_indices = @transform_3, window_bounds = array<i64: 8, 16>}, {pipeline_mode = #tpu.pipeline_mode<synchronous>, transform_indices = @transform_4, window_bounds = array<i64: 32, 3>}, {transform_indices = @transform_5, window_bounds = array<i64: 8, 256>}]} {
    %c0 = arith.constant 0 : index
    %c0_0 = arith.constant 0 : index
    %0 = vector.load %arg5[%c0, %c0_0] : memref<32x3xf32, #tpu.memory_space<vmem>>, vector<32x3xf32>
    %c0_1 = arith.constant 0 : index
    %c0_2 = arith.constant 0 : index
    %1 = vector.load %arg1[%c0_1, %c0_2] : memref<256x8xf32, #tpu.memory_space<vmem>>, vector<256x8xf32>
    %2 = arith.truncf %1 : vector<256x8xf32> to vector<256x8xbf16>
    %c0_3 = arith.constant 0 : index
    %c0_4 = arith.constant 0 : index
    %3 = vector.load %arg2[%c0_3, %c0_4] : memref<32x8xbf16, #tpu.memory_space<vmem>>, vector<32x8xbf16>
    %4 = vector.extract_strided_slice %0 {offsets = [0, 0], sizes = [32, 1], strides = [1, 1]} : vector<32x3xf32> to vector<32x1xf32>
    %cst = arith.constant dense<0.000000e+00> : vector<32x256xf32>
    %5 = tpu.matmul %3, %2, %cst {dimension_numbers = #tpu.dot_dimension_numbers<[1], [1], [0], [0], [0, 0, 1, 0], [], []>} : vector<32x8xbf16>, vector<256x8xbf16>, vector<32x256xf32> -> vector<32x256xf32>
    %6 = vector.broadcast %4 : vector<32x1xf32> to vector<32x256xf32>
    %7 = arith.addf %5, %6 : vector<32x256xf32>
    %cst_5 = arith.constant 0.000000e+00 : f32
    %8 = vector.broadcast %cst_5 : f32 to vector<32x256xf32>
    %9 = arith.maximumf %7, %8 : vector<32x256xf32>
    %10 = arith.truncf %9 : vector<32x256xf32> to vector<32x256xbf16>
    %c0_6 = arith.constant 0 : index
    %c0_7 = arith.constant 0 : index
    %11 = vector.load %arg3[%c0_6, %c0_7] : memref<16x32xbf16, #tpu.memory_space<vmem>>, vector<16x32xbf16>
    %12 = vector.extract_strided_slice %0 {offsets = [0, 1], sizes = [16, 1], strides = [1, 1]} : vector<32x3xf32> to vector<16x1xf32>
    %cst_8 = arith.constant dense<0.000000e+00> : vector<16x256xf32>
    %13 = tpu.matmul %11, %10, %cst_8 {dimension_numbers = #tpu.dot_dimension_numbers<[1], [0], [0], [1], [0, 0, 1, 1], [], []>} : vector<16x32xbf16>, vector<32x256xbf16>, vector<16x256xf32> -> vector<16x256xf32>
    %14 = vector.broadcast %12 : vector<16x1xf32> to vector<16x256xf32>
    %15 = arith.addf %13, %14 : vector<16x256xf32>
    %cst_9 = arith.constant 0.000000e+00 : f32
    %16 = vector.broadcast %cst_9 : f32 to vector<16x256xf32>
    %17 = arith.maximumf %15, %16 : vector<16x256xf32>
    %18 = arith.truncf %17 : vector<16x256xf32> to vector<16x256xbf16>
    %c0_10 = arith.constant 0 : index
    %c0_11 = arith.constant 0 : index
    %19 = vector.load %arg4[%c0_10, %c0_11] : memref<8x16xbf16, #tpu.memory_space<vmem>>, vector<8x16xbf16>
    %20 = vector.extract_strided_slice %0 {offsets = [0, 2], sizes = [8, 1], strides = [1, 1]} : vector<32x3xf32> to vector<8x1xf32>
    %cst_12 = arith.constant dense<0.000000e+00> : vector<8x256xf32>
    %21 = tpu.matmul %19, %18, %cst_12 {dimension_numbers = #tpu.dot_dimension_numbers<[1], [0], [0], [1], [0, 0, 1, 1], [], []>} : vector<8x16xbf16>, vector<16x256xbf16>, vector<8x256xf32> -> vector<8x256xf32>
    %22 = vector.broadcast %20 : vector<8x1xf32> to vector<8x256xf32>
    %23 = arith.addf %21, %22 : vector<8x256xf32>
    %c0_13 = arith.constant 0 : index
    %c0_14 = arith.constant 0 : index
    %24 = vector.load %arg6[%c0_13, %c0_14] : memref<8x256xf32, #tpu.memory_space<vmem>>, vector<8x256xf32>
    tpu.vector_store %arg6[%c0_13, %c0_14], %23 {strides = array<i32>} : memref<8x256xf32, #tpu.memory_space<vmem>>, vector<8x256xf32>,
    return
  }
  func.func @transform_0(%arg0: i32) -> (i32, i32) {
    %c0_i32 = arith.constant 0 : i32
    %c0_i32_0 = arith.constant 0 : i32
    return %arg0, %c0_i32 : i32, i32
  }
  func.func @transform_1(%arg0: i32) -> (i32, i32) {
    %c0_i32 = arith.constant 0 : i32
    %c0_i32_0 = arith.constant 0 : i32
    %c0_i32_1 = arith.constant 0 : i32
    return %c0_i32, %c0_i32_0 : i32, i32
  }
  func.func @transform_2(%arg0: i32) -> (i32, i32) {
    %c0_i32 = arith.constant 0 : i32
    %c0_i32_0 = arith.constant 0 : i32
    %c0_i32_1 = arith.constant 0 : i32
    return %c0_i32, %c0_i32_0 : i32, i32
  }
  func.func @transform_3(%arg0: i32) -> (i32, i32) {
    %c0_i32 = arith.constant 0 : i32
    %c0_i32_0 = arith.constant 0 : i32
    %c0_i32_1 = arith.constant 0 : i32
    return %c0_i32, %c0_i32_0 : i32, i32
  }
  func.func @transform_4(%arg0: i32) -> (i32, i32) {
    %c0_i32 = arith.constant 0 : i32
    %c0_i32_0 = arith.constant 0 : i32
    %c0_i32_1 = arith.constant 0 : i32
    return %c0_i32, %c0_i32_0 : i32, i32
  }
  func.func @transform_5(%arg0: i32) -> (i32, i32) {
    %c0_i32 = arith.constant 0 : i32
    %c0_i32_0 = arith.constant 0 : i32
    return %c0_i32, %arg0 : i32, i32
  }
}

</mosaic_0001>

<llo_original>
// kernel: mlp_forward.1
$region0: #{mlp_forward.1}
  #allocation0 [shape = 'u32[]', space=smem, size = 0x4, offset = 0x4, fixed_abs, tag = 'smem constant byte address 0x4 - core index']
  #allocation1 [shape = 'u32[72,128]{1,0:T(1,128)}', space=vmem, size = 0x9000, scoped, tag = 'internal scratch']
  %s0 = inlined_call_operand.vmem [shape: f32[256,8], index: 0, kind: input, shape index: {}]
  %s1 = inlined_call_operand.vmem [shape: bf16[32,8], index: 1, kind: input, shape index: {}]
  %s2 = inlined_call_operand.vmem [shape: bf16[16,32], index: 2, kind: input, shape index: {}]
  %s3 = inlined_call_operand.vmem [shape: bf16[8,16], index: 3, kind: input, shape index: {}]
  %s4 = inlined_call_operand.vmem [shape: f32[32,3], index: 4, kind: input, shape index: {}]
  %s5 = inlined_call_operand.vmem [shape: f32[8,256], index: 5, kind: output, shape index: {}]
  %s6 = sld [smem:[#allocation0]]
  $region30: #{mlp_forward.1} parent=0
    _
  %s8 = ssub.s32 1, %s6
  %s9 = scalar_select 0, %s8, %s6
  // Predicated region
  $region2: #{mlp_forward.1} parent=0 // pred_check
    _
  $region3: #{mlp_forward.1} parent=0 // pred_check_branch
    %11 = sbr.rel (0) target = $region5
  $region4: #{mlp_forward.1} parent=0 // pred_region
    _
  $region5: #{mlp_forward.1} parent=0 // pred_fallthru
    _
  // Predicated region
  $region6: #{mlp_forward.1} parent=0 // pred_check
    _
  $region7: #{mlp_forward.1} parent=0 // pred_check_branch
    %13 = sbr.rel (0) target = $region9
  $region8: #{mlp_forward.1} parent=0 // pred_region
    _
  $region9: #{mlp_forward.1} parent=0 // pred_fallthru
    _
  // Predicated region
  $region10: #{mlp_forward.1} parent=0 // pred_check
    _
  $region11: #{mlp_forward.1} parent=0 // pred_check_branch
    %15 = sbr.rel (0) target = $region13
  $region12: #{mlp_forward.1} parent=0 // pred_region
    _
  $region13: #{mlp_forward.1} parent=0 // pred_fallthru
    _
  // Predicated region
  $region14: #{mlp_forward.1} parent=0 // pred_check
    _
  $region15: #{mlp_forward.1} parent=0 // pred_check_branch
    %17 = sbr.rel (0) target = $region17
  $region16: #{mlp_forward.1} parent=0 // pred_region
    _
  $region17: #{mlp_forward.1} parent=0 // pred_fallthru
    _
  // Predicated region
  $region18: #{mlp_forward.1} parent=0 // pred_check
    _
  $region19: #{mlp_forward.1} parent=0 // pred_check_branch
    %19 = sbr.rel (0) target = $region21
  $region20: #{mlp_forward.1} parent=0 // pred_region
    _
  $region21: #{mlp_forward.1} parent=0 // pred_fallthru
    _
  %v21 = vld [vmem:[%s4] sm:$0xff]
  %v22 = vld [vmem:[%s4 + $0x8] sm:$0xff]
  %v23 = vld [vmem:[%s4 + $0x10] sm:$0xff]
  %v24 = vld [vmem:[%s4 + $0x18] sm:$0xff]
  %v25 = vld [vmem:[%s0] sm:$0xff]
  %v26 = vld [vmem:[%s0 + $0x8] sm:$0xff]
  %v27 = vld [vmem:[%s0 + $0x10] sm:$0xff]
  %v28 = vld [vmem:[%s0 + $0x18] sm:$0xff]
  %v29 = vld [vmem:[%s0 + $0x20] sm:$0xff]
  %v30 = vld [vmem:[%s0 + $0x28] sm:$0xff]
  %v31 = vld [vmem:[%s0 + $0x30] sm:$0xff]
  %v32 = vld [vmem:[%s0 + $0x38] sm:$0xff]
  %v33 = vld [vmem:[%s0 + $0x40] sm:$0xff]
  %v34 = vld [vmem:[%s0 + $0x48] sm:$0xff]
  %v35 = vld [vmem:[%s0 + $0x50] sm:$0xff]
  %v36 = vld [vmem:[%s0 + $0x58] sm:$0xff]
  %v37 = vld [vmem:[%s0 + $0x60] sm:$0xff]
  %v38 = vld [vmem:[%s0 + $0x68] sm:$0xff]
  %v39 = vld [vmem:[%s0 + $0x70] sm:$0xff]
  %v40 = vld [vmem:[%s0 + $0x78] sm:$0xff]
  %v41 = vld [vmem:[%s0 + $0x80] sm:$0xff]
  %v42 = vld [vmem:[%s0 + $0x88] sm:$0xff]
  %v43 = vld [vmem:[%s0 + $0x90] sm:$0xff]
  %v44 = vld [vmem:[%s0 + $0x98] sm:$0xff]
  %v45 = vld [vmem:[%s0 + $0xa0] sm:$0xff]
  %v46 = vld [vmem:[%s0 + $0xa8] sm:$0xff]
  %v47 = vld [vmem:[%s0 + $0xb0] sm:$0xff]
  %v48 = vld [vmem:[%s0 + $0xb8] sm:$0xff]
  %v49 = vld [vmem:[%s0 + $0xc0] sm:$0xff]
  %v50 = vld [vmem:[%s0 + $0xc8] sm:$0xff]
  %v51 = vld [vmem:[%s0 + $0xd0] sm:$0xff]
  %v52 = vld [vmem:[%s0 + $0xd8] sm:$0xff]
  %v53 = vld [vmem:[%s0 + $0xe0] sm:$0xff]
  %v54 = vld [vmem:[%s0 + $0xe8] sm:$0xff]
  %v55 = vld [vmem:[%s0 + $0xf0] sm:$0xff]
  %v56 = vld [vmem:[%s0 + $0xf8] sm:$0xff]
  %v57 = vpack.c.bf16 %v26, %v25
  %v58 = vpack.c.bf16 %v28, %v27
  %v59 = vpack.c.bf16 %v30, %v29
  %v60 = vpack.c.bf16 %v32, %v31
  %v61 = vpack.c.bf16 %v34, %v33
  %v62 = vpack.c.bf16 %v36, %v35
  %v63 = vpack.c.bf16 %v38, %v37
  %v64 = vpack.c.bf16 %v40, %v39
  %v65 = vpack.c.bf16 %v42, %v41
  %v66 = vpack.c.bf16 %v44, %v43
  %v67 = vpack.c.bf16 %v46, %v45
  %v68 = vpack.c.bf16 %v48, %v47
  %v69 = vpack.c.bf16 %v50, %v49
  %v70 = vpack.c.bf16 %v52, %v51
  %v71 = vpack.c.bf16 %v54, %v53
  %v72 = vpack.c.bf16 %v56, %v55
  %v73 = vld [vmem:[%s1] sm:$0xf]
  %v74 = vld [vmem:[%s1 + $0x4] sm:$0xf]
  %v75 = vld [vmem:[%s1 + $0x8] sm:$0xf]
  %v76 = vld [vmem:[%s1 + $0xc] sm:$0xf]
  %78 = vset.pattern.permute.xlu0 0
  %79 = vperm.xlu0 %78, %v21
  %v80 = vpop.permute.xlu0 %79
  %83 = vset.pattern.permute.xlu0 0
  %84 = vperm.xlu0 %83, %v22
  %v85 = vpop.permute.xlu0 %84
  %88 = vset.pattern.permute.xlu0 0
  %89 = vperm.xlu0 %88, %v23
  %v90 = vpop.permute.xlu0 %89
  %93 = vset.pattern.permute.xlu0 0
  %94 = vperm.xlu0 %93, %v24
  %v95 = vpop.permute.xlu0 %94
  %v101 = vunpack.c.l.b16 %v73
  %v102 = vunpack.c.l.b16 %v74
  %v103 = vunpack.c.l.b16 %v75
  %v104 = vunpack.c.l.b16 %v76
  %v105 = vpack.c.b16 %v102, %v101
  %v106 = vpack.c.b16 %v104, %v103
  %vm107 = vcmask 64512
  %v109 = vsel %vm107, %v105, 0
  %v112 = vsel %vm107, %v106, 0
  %v115 = vsel %vm107, %v57, 0
  %v118 = vsel %vm107, %v58, 0
  %v121 = vsel %vm107, %v59, 0
  %v124 = vsel %vm107, %v60, 0
  %v127 = vsel %vm107, %v61, 0
  %v130 = vsel %vm107, %v62, 0
  %v133 = vsel %vm107, %v63, 0
  %v136 = vsel %vm107, %v64, 0
  %v139 = vsel %vm107, %v65, 0
  %v142 = vsel %vm107, %v66, 0
  %v145 = vsel %vm107, %v67, 0
  %v148 = vsel %vm107, %v68, 0
  %v151 = vsel %vm107, %v69, 0
  %v154 = vsel %vm107, %v70, 0
  %v157 = vsel %vm107, %v71, 0
  %v160 = vsel %vm107, %v72, 0
  %162 = vmatpush.bf16.xpose.msra.mxu0 %v136
  %163 = vmatpush.bf16.xpose.msra.mxu0 %v133
  %164 = vmatpush.bf16.xpose.msra.mxu0 %v130
  %165 = vmatpush.bf16.xpose.msra.mxu0 %v127
  %166 = vmatpush.bf16.xpose.msra.mxu0 %v124
  %167 = vmatpush.bf16.xpose.msra.mxu0 %v121
  %168 = vmatpush.bf16.xpose.msra.mxu0 %v118
  %169 = vmatpush.bf16.xpose.msra.mxu0 %v115
  %170 = vmatmul.bf16.gmra.mxu0 %v109
  %v171 = vpop.f32.mrf.mxu0
  %v172 = vadd.f32 %v80, %v171
  %v173 = vpop.f32.mrf.mxu0
  %v174 = vadd.f32 %v85, %v173
  %175 = vmatmul.bf16.gmra.mxu0 %v112
  %v176 = vpop.f32.mrf.mxu0
  %v177 = vadd.f32 %v90, %v176
  %v178 = vpop.f32.mrf.mxu0
  %v179 = vadd.f32 %v95, %v178
  %180 = vdwg.mxu0
  %181 = vmatpush.bf16.xpose.msra.mxu0 %v160
  %182 = vmatpush.bf16.xpose.msra.mxu0 %v157
  %183 = vmatpush.bf16.xpose.msra.mxu0 %v154
  %184 = vmatpush.bf16.xpose.msra.mxu0 %v151
  %185 = vmatpush.bf16.xpose.msra.mxu0 %v148
  %186 = vmatpush.bf16.xpose.msra.mxu0 %v145
  %187 = vmatpush.bf16.xpose.msra.mxu0 %v142
  %188 = vmatpush.bf16.xpose.msra.mxu0 %v139
  %189 = vmatmul.bf16.gmra.mxu0 %v109
  %v190 = vpop.f32.mrf.mxu0
  %v191 = vadd.f32 %v80, %v190
  %v192 = vpop.f32.mrf.mxu0
  %v193 = vadd.f32 %v85, %v192
  %194 = vmatmul.bf16.gmra.mxu0 %v112
  %v195 = vpop.f32.mrf.mxu0
  %v196 = vadd.f32 %v90, %v195
  %v197 = vpop.f32.mrf.mxu0
  %v198 = vadd.f32 %v95, %v197
  %199 = vdwg.mxu0
  %v200 = vmax.f32 %v172, 0.0
  %v201 = vmax.f32 %v191, 0.0
  %v202 = vmax.f32 %v174, 0.0
  %v203 = vmax.f32 %v193, 0.0
  %v204 = vmax.f32 %v177, 0.0
  %v205 = vmax.f32 %v196, 0.0
  %v206 = vmax.f32 %v179, 0.0
  %v207 = vmax.f32 %v198, 0.0
  %v208 = vpack.c.bf16 %v202, %v200
  %v209 = vpack.c.bf16 %v203, %v201
  %v210 = vpack.c.bf16 %v206, %v204
  %v211 = vpack.c.bf16 %v207, %v205
  %v212 = vld [vmem:[%s2] sm:$0xf]
  %v213 = vld [vmem:[%s2 + $0x4] sm:$0xf]
  %214 = vset.pattern.permute.xlu0 1
  %215 = vperm.xlu0 %214, %v21
  %v216 = vpop.permute.xlu0 %215
  %218 = vset.pattern.permute.xlu0 1
  %219 = vperm.xlu0 %218, %v22
  %v220 = vpop.permute.xlu0 %219
  %v224 = vunpack.c.l.b16 %v212
  %v225 = vunpack.c.l.b16 %v213
  %v226 = vpack.c.b16 %v225, %v224
  %vm227 = vcmask 261120
  %v229 = vsel %vm227, %v226, 0
  %231 = vmatpush.bf16.msra.mxu0 0
  %232 = vmatpush.bf16.msra.mxu0 0
  %233 = vmatpush.bf16.msra.mxu0 0
  %234 = vmatpush.bf16.msra.mxu0 0
  %235 = vmatpush.bf16.msra.mxu0 0
  %236 = vmatpush.bf16.msra.mxu0 0
  %237 = vmatpush.bf16.msra.mxu0 %v210
  %238 = vmatpush.bf16.msra.mxu0 %v208
  %239 = vmatmul.bf16.gmra.mxu0 %v229
  %v240 = vpop.f32.mrf.mxu0
  %v241 = vadd.f32 %v216, %v240
  %v242 = vpop.f32.mrf.mxu0
  %v243 = vadd.f32 %v220, %v242
  %244 = vdwg.mxu0
  %245 = vmatpush.bf16.msra.mxu0 0
  %246 = vmatpush.bf16.msra.mxu0 0
  %247 = vmatpush.bf16.msra.mxu0 0
  %248 = vmatpush.bf16.msra.mxu0 0
  %249 = vmatpush.bf16.msra.mxu0 0
  %250 = vmatpush.bf16.msra.mxu0 0
  %251 = vmatpush.bf16.msra.mxu0 %v211
  %252 = vmatpush.bf16.msra.mxu0 %v209
  %253 = vmatmul.bf16.gmra.mxu0 %v229
  %v254 = vpop.f32.mrf.mxu0
  %v255 = vadd.f32 %v216, %v254
  %v256 = vpop.f32.mrf.mxu0
  %v257 = vadd.f32 %v220, %v256
  %258 = vdwg.mxu0
  %v259 = vmax.f32 %v241, 0.0
  %v260 = vmax.f32 %v255, 0.0
  %v261 = vmax.f32 %v243, 0.0
  %v262 = vmax.f32 %v257, 0.0
  %v263 = vpack.c.bf16 %v261, %v259
  %v264 = vpack.c.bf16 %v262, %v260
  %v265 = vld [vmem:[%s3] sm:$0xf]
  %266 = vset.pattern.permute.xlu0 2
  %267 = vperm.xlu0 %266, %v21
  %v268 = vpop.permute.xlu0 %267
  %vm270 = vcmask 130048
  %v272 = vsel %vm270, %v265, 0
  %274 = vmatpush.bf16.msra.mxu0 0
  %275 = vmatpush.bf16.msra.mxu0 0
  %276 = vmatpush.bf16.msra.mxu0 0
  %277 = vmatpush.bf16.msra.mxu0 0
  %278 = vmatpush.bf16.msra.mxu0 0
  %279 = vmatpush.bf16.msra.mxu0 0
  %280 = vmatpush.bf16.msra.mxu0 0
  %281 = vmatpush.bf16.msra.mxu0 %v263
  %282 = vmatmul.bf16.gmra.mxu0 %v272
  %v283 = vpop.f32.mrf.mxu0
  %v284 = vadd.f32 %v268, %v283
  %v285 = vpop.f32.mrf.mxu0
  %286 = vdwg.mxu0
  %287 = vmatpush.bf16.msra.mxu0 0
  %288 = vmatpush.bf16.msra.mxu0 0
  %289 = vmatpush.bf16.msra.mxu0 0
  %290 = vmatpush.bf16.msra.mxu0 0
  %291 = vmatpush.bf16.msra.mxu0 0
  %292 = vmatpush.bf16.msra.mxu0 0
  %293 = vmatpush.bf16.msra.mxu0 0
  %294 = vmatpush.bf16.msra.mxu0 %v264
  %295 = vmatmul.bf16.gmra.mxu0 %v272
  %v296 = vpop.f32.mrf.mxu0
  %v297 = vadd.f32 %v268, %v296
  %v298 = vpop.f32.mrf.mxu0
  %299 = vdwg.mxu0
  %300 = vst [vmem:[%s5] sm:$0xff] %v284
  %301 = vst [vmem:[%s5 + $0x8] sm:$0xff] %v297
  // Predicated region
  $region22: #{mlp_forward.1} parent=0 // pred_check
    _
  $region23: #{mlp_forward.1} parent=0 // pred_check_branch
    %303 = sbr.rel (0) target = $region25
  $region24: #{mlp_forward.1} parent=0 // pred_region
    _
  $region25: #{mlp_forward.1} parent=0 // pred_fallthru
    _
  // Predicated region
  $region26: #{mlp_forward.1} parent=0 // pred_check
    _
  $region27: #{mlp_forward.1} parent=0 // pred_check_branch
    %305 = sbr.rel (0) target = $region29
  $region28: #{mlp_forward.1} parent=0 // pred_region
    _
  $region29: #{mlp_forward.1} parent=0 // pred_fallthru
    _

</llo_original>
